<compile_context>
chip_gen: v5e
topology: v5e:2x2
jax: 0.10.0
libtpu: 0.0.40
codegen_flags: <defaults>
</compile_context>

<pallas_src>
import functools

import jax
import jax.numpy as jnp
from jax.experimental import pallas as pl
from jax.experimental.pallas import tpu as pltpu

EPS = 1e-5
NEG_SLOPE = 0.2
LANE = 128
SUBLANE = 8


def _round_up(v, m):
    return (v + m - 1) // m * m


# ----------------------------------------------------------------------------
# Kernel: one batch tile through in_net -> layers_num x BasicLayer -> out_net
# ----------------------------------------------------------------------------
def setop_encdec_kernel(
    x_ref,        # (TB, Din_p)
    w_in_ref,     # (Din_p, L_p)
    w_l_ref,      # (layers_num, L_p, L_p)
    w_out_ref,    # (L_p, Dout_p)
    b_ref,        # (layers_num + 2, Dmax)  packed biases (BN pre-folded)
    o_ref,        # (TB, Dout_p)
    *, layers_num: int, latent_p: int, out_p: int,
):
    # ---- in_net: (folded Linear+BN) + LeakyReLU ----
    h = jnp.dot(x_ref[...], w_in_ref[...], preferred_element_type=jnp.float32)
    h = h + b_ref[0:1, :latent_p]
    h = jnp.where(h > 0, h, NEG_SLOPE * h)

    # ---- stacked BasicLayers: (folded Linear+BN) + LeakyReLU ----
    # Static unroll is fine for small layer counts.
    # TODO(synk): switch to lax.fori_loop(..., unroll=True) if layers_num > 8
    # to bound vreg live ranges / compile time.
    for i in range(layers_num):
        h = jnp.dot(h, w_l_ref[i], preferred_element_type=jnp.float32)
        h = h + b_ref[i + 1:i + 2, :latent_p]
        h = jnp.where(h > 0, h, NEG_SLOPE * h)

    # ---- out_net: Linear + Dropout(identity in eval) + ReLU ----
    out = jnp.dot(h, w_out_ref[...], preferred_element_type=jnp.float32)
    out = out + b_ref[layers_num + 1:layers_num + 2, :out_p]
    o_ref[...] = jnp.maximum(out, 0.0)


# ----------------------------------------------------------------------------
# Wrapper: BN folding, lane padding, bias packing, batch grid
# ----------------------------------------------------------------------------
def setop_encoder_decoder(x, params, layers_num):
    batch, input_dim = x.shape
    latent_dim = params["w_in"].shape[1]
    output_dim = params["w_out"].shape[1]

    # ---- fold inference BatchNorm into the preceding Linear ----
    def fold(w, b, g, bt, rm, rv):
        scale = g * jax.lax.rsqrt(rv + EPS)        # (..., 1, d)
        return w * scale, (b - rm) * scale + bt

    w_in, b_in = fold(params["w_in"], params["b_in"], params["g_in"],
                      params["bt_in"], params["rm_in"], params["rv_in"])
    w_l, b_l = fold(params["w_l"], params["b_l"], params["g_l"],
                    params["bt_l"], params["rm_l"], params["rv_l"])
    w_out, b_out = params["w_out"], params["b_out"]

    # ---- pad feature dims to lane-dense multiples of 128 ----
    din_p = _round_up(input_dim, LANE)
    lat_p = _round_up(latent_dim, LANE)
    dout_p = _round_up(output_dim, LANE)
    dmax = max(lat_p, dout_p)

    # ---- batch tile selection ----
    if batch >= 512:
        tb = 512
    elif batch >= 128:
        tb = 128
    else:
        tb = _round_up(batch, SUBLANE)
    b_p = _round_up(batch, tb)

    f32 = jnp.float32
    x_p = jnp.zeros((b_p, din_p), f32).at[:batch, :input_dim].set(x)
    w_in_p = (jnp.zeros((din_p, lat_p), f32)
              .at[:input_dim, :latent_dim].set(w_in))
    w_l_p = (jnp.zeros((layers_num, lat_p, lat_p), f32)
             .at[:, :latent_dim, :latent_dim].set(w_l))
    w_out_p = (jnp.zeros((lat_p, dout_p), f32)
               .at[:latent_dim, :output_dim].set(w_out))

    b_pack = jnp.zeros((layers_num + 2, dmax), f32)
    b_pack = b_pack.at[0, :latent_dim].set(b_in.reshape(-1))
    b_pack = b_pack.at[1:layers_num + 1, :latent_dim].set(
        b_l.reshape(layers_num, latent_dim))
    b_pack = b_pack.at[layers_num + 1, :output_dim].set(b_out.reshape(-1))

    grid = (b_p // tb,)
    kernel = functools.partial(setop_encdec_kernel, layers_num=layers_num,
                               latent_p=lat_p, out_p=dout_p)

    # Rough VMEM budget: double-buffered x/out tiles + resident weights +
    # intermediate h, plus headroom.
    vmem_bytes = 4 * (
        2 * tb * (din_p + dout_p)
        + 2 * (din_p * lat_p + layers_num * lat_p * lat_p
               + lat_p * dout_p + (layers_num + 2) * dmax)
        + tb * lat_p
    ) + (4 << 20)
    vmem_limit = int(min(max(vmem_bytes, 8 << 20), 48 << 20))

    out_padded = pl.pallas_call(
        kernel,
        out_shape=jax.ShapeDtypeStruct((b_p, dout_p), jnp.float32),
        grid_spec=pltpu.PrefetchScalarGridSpec(
            num_scalar_prefetch=0,
            grid=grid,
            in_specs=[
                pl.BlockSpec((tb, din_p), lambda i: (i, 0)),          # x tile
                pl.BlockSpec((din_p, lat_p), lambda i: (0, 0)),       # w_in
                pl.BlockSpec((layers_num, lat_p, lat_p),
                             lambda i: (0, 0, 0)),                    # w_l
                pl.BlockSpec((lat_p, dout_p), lambda i: (0, 0)),      # w_out
                pl.BlockSpec((layers_num + 2, dmax),
                             lambda i: (0, 0)),                       # biases
            ],
            out_specs=pl.BlockSpec((tb, dout_p), lambda i: (i, 0)),
        ),
        compiler_params=pltpu.CompilerParams(
            dimension_semantics=("parallel",),
            vmem_limit_bytes=vmem_limit),
    )(x_p, w_in_p, w_l_p, w_out_p, b_pack)

    return out_padded[:batch, :output_dim]


# ----------------------------------------------------------------------------
# Parameter construction (PyTorch weights pre-transposed to (in, out))
# ----------------------------------------------------------------------------
def make_params(key, input_dim, latent_dim, output_dim, layers_num):
    ks = jax.random.split(key, 12)
    f32 = jnp.float32
    return {
        # in_net
        "w_in": jax.random.normal(ks[0], (input_dim, latent_dim), f32) * 0.1,
        "b_in": jax.random.normal(ks[1], (1, latent_dim), f32) * 0.1,
        "g_in": 1.0 + 0.1 * jax.random.normal(ks[2], (1, latent_dim), f32),
        "bt_in": 0.1 * jax.random.normal(ks[3], (1, latent_dim), f32),
        "rm_in": 0.1 * jax.random.normal(ks[4], (1, latent_dim), f32),
        "rv_in": 1.0 + 0.1 * jnp.abs(jax.random.normal(ks[5], (1, latent_dim), f32)),
        # BasicLayers (stacked)
        "w_l": jax.random.normal(ks[6], (layers_num, latent_dim, latent_dim), f32) * 0.1,
        "b_l": jax.random.normal(ks[7], (layers_num, 1, latent_dim), f32) * 0.1,
        "g_l": 1.0 + 0.1 * jax.random.normal(ks[8], (layers_num, 1, latent_dim), f32),
        "bt_l": 0.1 * jax.random.normal(ks[9], (layers_num, 1, latent_dim), f32),
        "rm_l": 0.1 * jax.random.normal(ks[10], (layers_num, 1, latent_dim), f32),
        "rv_l": 1.0 + 0.1 * jnp.abs(
            jax.random.normal(ks[11], (layers_num, 1, latent_dim), f32)),
        # out_net
        "w_out": jax.random.normal(jax.random.fold_in(key, 99),
                                   (latent_dim, output_dim), f32) * 0.1,
        "b_out": jax.random.normal(jax.random.fold_in(key, 100),
                                   (1, output_dim), f32) * 0.1,
    }


def reference(x, p, layers_num):
    """Pure-JAX reference with un-folded BN (PyTorch eval semantics)."""
    def bn_leaky(h, g, b, rm, rv):
        h = (h - rm) / jnp.sqrt(rv + EPS) * g + b
        return jnp.where(h > 0, h, NEG_SLOPE * h)

    h = x @ p["w_in"] + p["b_in"]
    h = bn_leaky(h, p["g_in"], p["bt_in"], p["rm_in"], p["rv_in"])
    for i in range(layers_num):
        h = h @ p["w_l"][i] + p["b_l"][i]
        h = bn_leaky(h, p["g_l"][i], p["bt_l"][i], p["rm_l"][i], p["rv_l"][i])
    out = h @ p["w_out"] + p["b_out"]
    return jnp.maximum(out, 0.0)


if __name__ == "__main__":
    input_dim, latent_dim, output_dim = 32, 32, 16
    layers_num = 2
    batch = 256   # tiled as 2 x 128-row grid steps

    key = jax.random.PRNGKey(0)
    kx, kp = jax.random.split(key)
    x = jax.random.normal(kx, (batch, input_dim), jnp.float32)
    params = make_params(kp, input_dim, latent_dim, output_dim, layers_num)

    out = setop_encoder_decoder(x, params, layers_num)
    out = jax.block_until_ready(out)

    ref = reference(x, params, layers_num)
    assert out.shape == (batch, output_dim)
    assert jnp.allclose(out, ref, atol=1e-4, rtol=1e-4), float(
        jnp.max(jnp.abs(out - ref)))

    print("KERNEL_OK")
</pallas_src>

<mosaic_0001>
module attributes {stable_mosaic.version = 11 : i64} {
  func.func @setop_encdec_kernel(%arg0: i32, %arg1: memref<128x128xf32, #tpu.memory_space<vmem>>, %arg2: memref<128x128xf32, #tpu.memory_space<vmem>>, %arg3: memref<2x128x128xf32, #tpu.memory_space<vmem>>, %arg4: memref<128x128xf32, #tpu.memory_space<vmem>>, %arg5: memref<4x128xf32, #tpu.memory_space<vmem>>, %arg6: memref<128x128xf32, #tpu.memory_space<vmem>>) attributes {dimension_semantics = [#tpu.dimension_semantics<parallel>], iteration_bounds = array<i64: 2>, scalar_prefetch = 0 : i64, scratch_operands = 0 : i64, tpu.core_type = #tpu.core_type<tc>, window_params = [{transform_indices = @transform_0, window_bounds = array<i64: 128, 128>}, {pipeline_mode = #tpu.pipeline_mode<synchronous>, transform_indices = @transform_1, window_bounds = array<i64: 128, 128>}, {pipeline_mode = #tpu.pipeline_mode<synchronous>, transform_indices = @transform_2, window_bounds = array<i64: 2, 128, 128>}, {pipeline_mode = #tpu.pipeline_mode<synchronous>, transform_indices = @transform_3, window_bounds = array<i64: 128, 128>}, {pipeline_mode = #tpu.pipeline_mode<synchronous>, transform_indices = @transform_4, window_bounds = array<i64: 4, 128>}, {transform_indices = @transform_5, window_bounds = array<i64: 128, 128>}]} {
    %c0 = arith.constant 0 : index
    %c0_0 = arith.constant 0 : index
    %0 = vector.load %arg1[%c0, %c0_0] : memref<128x128xf32, #tpu.memory_space<vmem>>, vector<128x128xf32>
    %c0_1 = arith.constant 0 : index
    %c0_2 = arith.constant 0 : index
    %1 = vector.load %arg2[%c0_1, %c0_2] : memref<128x128xf32, #tpu.memory_space<vmem>>, vector<128x128xf32>
    %cst = arith.constant dense<0.000000e+00> : vector<128x128xf32>
    %2 = tpu.matmul %0, %1, %cst {dimension_numbers = #tpu.dot_dimension_numbers<[1], [0], [0], [1], [0, 0, 1, 1], [], []>} : vector<128x128xf32>, vector<128x128xf32>, vector<128x128xf32> -> vector<128x128xf32>
    %c0_3 = arith.constant 0 : index
    %c0_4 = arith.constant 0 : index
    %3 = vector.load %arg5[%c0_3, %c0_4] : memref<4x128xf32, #tpu.memory_space<vmem>>, vector<1x128xf32>
    %4 = vector.broadcast %3 : vector<1x128xf32> to vector<128x128xf32>
    %5 = arith.addf %2, %4 : vector<128x128xf32>
    %cst_5 = arith.constant 0.000000e+00 : f32
    %6 = vector.broadcast %cst_5 : f32 to vector<128x128xf32>
    %7 = arith.cmpf ogt, %5, %6 : vector<128x128xf32>
    %cst_6 = arith.constant 2.000000e-01 : f32
    %8 = vector.broadcast %cst_6 : f32 to vector<128x128xf32>
    %9 = arith.mulf %8, %5 : vector<128x128xf32>
    %10 = arith.select %7, %5, %9 : vector<128x128xi1>, vector<128x128xf32>
    %c0_7 = arith.constant 0 : index
    %c0_8 = arith.constant 0 : index
    %c0_9 = arith.constant 0 : index
    %11 = vector.load %arg3[%c0_7, %c0_8, %c0_9] : memref<2x128x128xf32, #tpu.memory_space<vmem>>, vector<1x128x128xf32>
    %12 = vector.shape_cast %11 : vector<1x128x128xf32> to vector<128x128xf32>
    %cst_10 = arith.constant dense<0.000000e+00> : vector<128x128xf32>
    %13 = tpu.matmul %10, %12, %cst_10 {dimension_numbers = #tpu.dot_dimension_numbers<[1], [0], [0], [1], [0, 0, 1, 1], [], []>} : vector<128x128xf32>, vector<128x128xf32>, vector<128x128xf32> -> vector<128x128xf32>
    %c1 = arith.constant 1 : index
    %c0_11 = arith.constant 0 : index
    %14 = vector.load %arg5[%c1, %c0_11] : memref<4x128xf32, #tpu.memory_space<vmem>>, vector<1x128xf32>
    %15 = vector.broadcast %14 : vector<1x128xf32> to vector<128x128xf32>
    %16 = arith.addf %13, %15 : vector<128x128xf32>
    %cst_12 = arith.constant 0.000000e+00 : f32
    %17 = vector.broadcast %cst_12 : f32 to vector<128x128xf32>
    %18 = arith.cmpf ogt, %16, %17 : vector<128x128xf32>
    %cst_13 = arith.constant 2.000000e-01 : f32
    %19 = vector.broadcast %cst_13 : f32 to vector<128x128xf32>
    %20 = arith.mulf %19, %16 : vector<128x128xf32>
    %21 = arith.select %18, %16, %20 : vector<128x128xi1>, vector<128x128xf32>
    %c1_14 = arith.constant 1 : index
    %c0_15 = arith.constant 0 : index
    %c0_16 = arith.constant 0 : index
    %22 = vector.load %arg3[%c1_14, %c0_15, %c0_16] : memref<2x128x128xf32, #tpu.memory_space<vmem>>, vector<1x128x128xf32>
    %23 = vector.shape_cast %22 : vector<1x128x128xf32> to vector<128x128xf32>
    %cst_17 = arith.constant dense<0.000000e+00> : vector<128x128xf32>
    %24 = tpu.matmul %21, %23, %cst_17 {dimension_numbers = #tpu.dot_dimension_numbers<[1], [0], [0], [1], [0, 0, 1, 1], [], []>} : vector<128x128xf32>, vector<128x128xf32>, vector<128x128xf32> -> vector<128x128xf32>
    %c2 = arith.constant 2 : index
    %c0_18 = arith.constant 0 : index
    %25 = vector.load %arg5[%c2, %c0_18] : memref<4x128xf32, #tpu.memory_space<vmem>>, vector<1x128xf32>
    %26 = vector.broadcast %25 : vector<1x128xf32> to vector<128x128xf32>
    %27 = arith.addf %24, %26 : vector<128x128xf32>
    %cst_19 = arith.constant 0.000000e+00 : f32
    %28 = vector.broadcast %cst_19 : f32 to vector<128x128xf32>
    %29 = arith.cmpf ogt, %27, %28 : vector<128x128xf32>
    %cst_20 = arith.constant 2.000000e-01 : f32
    %30 = vector.broadcast %cst_20 : f32 to vector<128x128xf32>
    %31 = arith.mulf %30, %27 : vector<128x128xf32>
    %32 = arith.select %29, %27, %31 : vector<128x128xi1>, vector<128x128xf32>
    %c0_21 = arith.constant 0 : index
    %c0_22 = arith.constant 0 : index
    %33 = vector.load %arg4[%c0_21, %c0_22] : memref<128x128xf32, #tpu.memory_space<vmem>>, vector<128x128xf32>
    %cst_23 = arith.constant dense<0.000000e+00> : vector<128x128xf32>
    %34 = tpu.matmul %32, %33, %cst_23 {dimension_numbers = #tpu.dot_dimension_numbers<[1], [0], [0], [1], [0, 0, 1, 1], [], []>} : vector<128x128xf32>, vector<128x128xf32>, vector<128x128xf32> -> vector<128x128xf32>
    %c3 = arith.constant 3 : index
    %c0_24 = arith.constant 0 : index
    %35 = vector.load %arg5[%c3, %c0_24] : memref<4x128xf32, #tpu.memory_space<vmem>>, vector<1x128xf32>
    %36 = vector.broadcast %35 : vector<1x128xf32> to vector<128x128xf32>
    %37 = arith.addf %34, %36 : vector<128x128xf32>
    %cst_25 = arith.constant 0.000000e+00 : f32
    %38 = vector.broadcast %cst_25 : f32 to vector<128x128xf32>
    %39 = arith.maximumf %37, %38 : vector<128x128xf32>
    %c0_26 = arith.constant 0 : index
    %c0_27 = arith.constant 0 : index
    %40 = vector.load %arg6[%c0_26, %c0_27] : memref<128x128xf32, #tpu.memory_space<vmem>>, vector<128x128xf32>
    tpu.vector_store %arg6[%c0_26, %c0_27], %39 {strides = array<i32>} : memref<128x128xf32, #tpu.memory_space<vmem>>, vector<128x128xf32>,
    return
  }
  func.func @transform_0(%arg0: i32) -> (i32, i32) {
    %c0_i32 = arith.constant 0 : i32
    %c0_i32_0 = arith.constant 0 : i32
    return %arg0, %c0_i32 : i32, i32
  }
  func.func @transform_1(%arg0: i32) -> (i32, i32) {
    %c0_i32 = arith.constant 0 : i32
    %c0_i32_0 = arith.constant 0 : i32
    %c0_i32_1 = arith.constant 0 : i32
    return %c0_i32, %c0_i32_0 : i32, i32
  }
  func.func @transform_2(%arg0: i32) -> (i32, i32, i32) {
    %c0_i32 = arith.constant 0 : i32
    %c0_i32_0 = arith.constant 0 : i32
    %c0_i32_1 = arith.constant 0 : i32
    %c0_i32_2 = arith.constant 0 : i32
    return %c0_i32, %c0_i32_0, %c0_i32_1 : i32, i32, i32
  }
  func.func @transform_3(%arg0: i32) -> (i32, i32) {
    %c0_i32 = arith.constant 0 : i32
    %c0_i32_0 = arith.constant 0 : i32
    %c0_i32_1 = arith.constant 0 : i32
    return %c0_i32, %c0_i32_0 : i32, i32
  }
  func.func @transform_4(%arg0: i32) -> (i32, i32) {
    %c0_i32 = arith.constant 0 : i32
    %c0_i32_0 = arith.constant 0 : i32
    %c0_i32_1 = arith.constant 0 : i32
    return %c0_i32, %c0_i32_0 : i32, i32
  }
  func.func @transform_5(%arg0: i32) -> (i32, i32) {
    %c0_i32 = arith.constant 0 : i32
    %c0_i32_0 = arith.constant 0 : i32
    return %arg0, %c0_i32 : i32, i32
  }
}

</mosaic_0001>

<llo_original>
// kernel: tpu_custom_call.1
$region0: #{tpu_custom_call.1}
  #allocation0 [shape = 'u32[]', space=smem, size = 0x4, offset = 0x4, fixed_abs, tag = 'smem constant byte address 0x4 - core index']
  #allocation1 [shape = 'u32[72,128]{1,0:T(1,128)}', space=vmem, size = 0x9000, scoped, tag = 'internal scratch']
  %s0 = inlined_call_operand.hbm [shape: f32[256,128], index: 0, kind: input, shape index: {}]
  %s1 = inlined_call_operand.hbm [shape: f32[128,128], index: 1, kind: input, shape index: {}]
  %s2 = inlined_call_operand.hbm [shape: f32[2,128,128], index: 2, kind: input, shape index: {}]
  %s3 = inlined_call_operand.hbm [shape: f32[128,128], index: 3, kind: input, shape index: {}]
  %s4 = inlined_call_operand.hbm [shape: f32[4,128], index: 4, kind: input, shape index: {}]
  %s5 = inlined_call_operand.hbm [shape: f32[256,128], index: 5, kind: output, shape index: {}]
  %s6 = sld [smem:[#allocation0]]
  $region73: #{tpu_custom_call.1} parent=0
    _
  %s8 = ssub.s32 1, %s6
  %s9 = scalar_select 0, %s8, %s6
  $region1: #{tpu_custom_call.1} parent=0
    #allocation2 [shape = 'u8[131072]{0}', space=vmem, size = 0x20000, scoped, tag = 'input window, operand 0']
    #allocation3 [shape = 's32[2]{0}', space=sflag, size = 0x8, scoped, tag = 'scoped memory for tpu_custom_call.1']
    #allocation4 [shape = 's32[2]{0}', space=sflag, size = 0x8, scoped, tag = 'scoped memory for tpu_custom_call.1']
    #allocation5 [shape = 'u8[65536]{0}', space=vmem, size = 0x10000, scoped, tag = 'input window, operand 1, single buffered']
    #allocation6 [shape = 's32[1]{0}', space=sflag, size = 0x4, scoped, tag = 'scoped memory for tpu_custom_call.1']
    #allocation7 [shape = 'u8[131072]{0}', space=vmem, size = 0x20000, scoped, tag = 'input window, operand 2, single buffered']
    #allocation8 [shape = 'u8[65536]{0}', space=vmem, size = 0x10000, scoped, tag = 'input window, operand 3, single buffered']
    #allocation9 [shape = 's32[1]{0}', space=sflag, size = 0x4, scoped, tag = 'scoped memory for tpu_custom_call.1']
    #allocation10 [shape = 'u8[2048]{0}', space=vmem, size = 0x800, scoped, tag = 'input window, operand 4, single buffered']
    #allocation11 [shape = 'u8[131072]{0}', space=vmem, size = 0x20000, scoped, tag = 'output window, operand 0']
    %10 = vsyncpa [#allocation3], 0
    %s11 = scalar_lea.sflag [#allocation3], 1
    %12 = vsyncpa %s11, 0
    %13 = vsyncpa [#allocation6], 0
    %14 = vsyncpa [#allocation9], 0
    %15 = vsyncpa [#allocation4], 0
    %s16 = scalar_lea.sflag [#allocation4], 1
    %17 = vsyncpa %s16, 0
    loop: start=0, step=1, limit=4
    $region2: #{tpu_custom_call.1} parent=1 // loop_pre_header
      _
    $region3: #{tpu_custom_call.1} parent=1 // loop_header
      %s19 = sphi 0, %s23
      %p20 = scmp.ge.s32.totalorder %s19, 4
      %s29 = sphi 0, %s31
      %s32 = sphi 0, %s29
      %s33 = sphi 0, %s32
      %s49 = sphi 0, %s33
      %s53 = sphi 0, %s53
      %s55 = sphi 0, %s53
      %s56 = sphi 0, %s55
      %s70 = sphi 0, %s56
      %s74 = sphi 0, %s74
      %s76 = sphi 0, %s74
      %s77 = sphi 0, %s76
      %s91 = sphi 0, %s77
      %s95 = sphi 0, %s95
      %s97 = sphi 0, %s95
      %s98 = sphi 0, %s97
      %s112 = sphi 0, %s98
      %s116 = sphi 0, %s116
      %s118 = sphi 0, %s116
      %s119 = sphi 0, %s118
      %s133 = sphi 0, %s119
      %s139 = sphi 0, %s141
      %s142 = sphi 0, %s139
      %s143 = sphi 0, %s142
      %s159 = sphi 0, %s143
    $region4: #{tpu_custom_call.1} parent=1 // loop_header_branch
      %22 = sbr.rel (%p20) target = $region8
    $region5: #{tpu_custom_call.1} parent=1 // loop_body
      %s24 = ssub.s32 %s19, 1
      %s25 = ssub.s32 %s19, 2
      %s26 = sadd.s32 %s19, 1
      %s27 = ssub.s32 %s19, %s26
      %p28 = scmp.eq.s32.totalorder %s27, 0
      %s30 = sadd.s32 %s29, 1
      %s31 = scalar_select %p28, %s29, %s30
      %p34 = pneg %p28
      %p35 = scmp.eq.s32.totalorder %s19, 1
      %p36 = por %p34, %p35
      %p37 = scmp.ne.s32.totalorder %s29, %s32
      %p38 = scmp.eq.s32.totalorder %s19, 0
      %p39 = por %p37, %p38
      %p40 = scmp.ne.s32.totalorder %s29, %s32
      %p41 = scmp.eq.s32.totalorder %s24, 1
      %p42 = por %p40, %p41
      %p43 = scmp.ne.s32.totalorder %s32, %s33
      %p44 = scmp.eq.s32.totalorder %s24, 0
      %p45 = por %p43, %p44
      %p46 = scmp.ne.s32.totalorder %s32, %s33
      %p47 = scmp.eq.s32.totalorder %s25, 1
      %p48 = por %p46, %p47
      %p50 = scmp.ne.s32.totalorder %s33, %s49
      %p51 = scmp.eq.s32.totalorder %s25, 0
      %p52 = por %p50, %p51
      %s54 = sadd.s32 %s53, 1
      %p57 = scmp.eq.s32.totalorder %s19, 1
      %p58 = scmp.ne.s32.totalorder %s53, %s55
      %p59 = scmp.eq.s32.totalorder %s19, 0
      %p60 = por %p58, %p59
      %p61 = scmp.ne.s32.totalorder %s53, %s55
      %p62 = scmp.eq.s32.totalorder %s24, 1
      %p63 = por %p61, %p62
      %p64 = scmp.ne.s32.totalorder %s55, %s56
      %p65 = scmp.eq.s32.totalorder %s24, 0
      %p66 = por %p64, %p65
      %p67 = scmp.ne.s32.totalorder %s55, %s56
      %p68 = scmp.eq.s32.totalorder %s25, 1
      %p69 = por %p67, %p68
      %p71 = scmp.ne.s32.totalorder %s56, %s70
      %p72 = scmp.eq.s32.totalorder %s25, 0
      %p73 = por %p71, %p72
      %s75 = sadd.s32 %s74, 1
      %p78 = scmp.eq.s32.totalorder %s19, 1
      %p79 = scmp.ne.s32.totalorder %s74, %s76
      %p80 = scmp.eq.s32.totalorder %s19, 0
      %p81 = por %p79, %p80
      %p82 = scmp.ne.s32.totalorder %s74, %s76
      %p83 = scmp.eq.s32.totalorder %s24, 1
      %p84 = por %p82, %p83
      %p85 = scmp.ne.s32.totalorder %s76, %s77
      %p86 = scmp.eq.s32.totalorder %s24, 0
      %p87 = por %p85, %p86
      %p88 = scmp.ne.s32.totalorder %s76, %s77
      %p89 = scmp.eq.s32.totalorder %s25, 1
      %p90 = por %p88, %p89
      %p92 = scmp.ne.s32.totalorder %s77, %s91
      %p93 = scmp.eq.s32.totalorder %s25, 0
      %p94 = por %p92, %p93
      %s96 = sadd.s32 %s95, 1
      %p99 = scmp.eq.s32.totalorder %s19, 1
      %p100 = scmp.ne.s32.totalorder %s95, %s97
      %p101 = scmp.eq.s32.totalorder %s19, 0
      %p102 = por %p100, %p101
      %p103 = scmp.ne.s32.totalorder %s95, %s97
      %p104 = scmp.eq.s32.totalorder %s24, 1
      %p105 = por %p103, %p104
      %p106 = scmp.ne.s32.totalorder %s97, %s98
      %p107 = scmp.eq.s32.totalorder %s24, 0
      %p108 = por %p106, %p107
      %p109 = scmp.ne.s32.totalorder %s97, %s98
      %p110 = scmp.eq.s32.totalorder %s25, 1
      %p111 = por %p109, %p110
      %p113 = scmp.ne.s32.totalorder %s98, %s112
      %p114 = scmp.eq.s32.totalorder %s25, 0
      %p115 = por %p113, %p114
      %s117 = sadd.s32 %s116, 1
      %p120 = scmp.eq.s32.totalorder %s19, 1
      %p121 = scmp.ne.s32.totalorder %s116, %s118
      %p122 = scmp.eq.s32.totalorder %s19, 0
      %p123 = por %p121, %p122
      %p124 = scmp.ne.s32.totalorder %s116, %s118
      %p125 = scmp.eq.s32.totalorder %s24, 1
      %p126 = por %p124, %p125
      %p127 = scmp.ne.s32.totalorder %s118, %s119
      %p128 = scmp.eq.s32.totalorder %s24, 0
      %p129 = por %p127, %p128
      %p130 = scmp.ne.s32.totalorder %s118, %s119
      %p131 = scmp.eq.s32.totalorder %s25, 1
      %p132 = por %p130, %p131
      %p134 = scmp.ne.s32.totalorder %s119, %s133
      %p135 = scmp.eq.s32.totalorder %s25, 0
      %p136 = por %p134, %p135
      %s137 = ssub.s32 %s19, %s26
      %p138 = scmp.eq.s32.totalorder %s137, 0
      %s140 = sadd.s32 %s139, 1
      %s141 = scalar_select %p138, %s139, %s140
      %p144 = pneg %p138
      %p145 = scmp.eq.s32.totalorder %s19, 1
      %p146 = por %p144, %p145
      %p147 = scmp.ne.s32.totalorder %s139, %s142
      %p148 = scmp.eq.s32.totalorder %s19, 0
      %p149 = por %p147, %p148
      %p150 = scmp.ne.s32.totalorder %s139, %s142
      %p151 = scmp.eq.s32.totalorder %s24, 1
      %p152 = por %p150, %p151
      %p153 = scmp.ne.s32.totalorder %s142, %s143
      %p154 = scmp.eq.s32.totalorder %s24, 0
      %p155 = por %p153, %p154
      %p156 = scmp.ne.s32.totalorder %s142, %s143
      %p157 = scmp.eq.s32.totalorder %s25, 1
      %p158 = por %p156, %p157
      %p160 = scmp.ne.s32.totalorder %s143, %s159
      %p161 = scmp.eq.s32.totalorder %s25, 0
      %p162 = por %p160, %p161
      %p163 = scmp.le.s32.totalorder 1, %s19
      %p164 = scmp.lt.s32.totalorder %s19, 3
      %p165 = pnand %p163, %p164
      %p166 = pneg %p165
      // Predicated region
      $region9: #{tpu_custom_call.1} parent=5 // pred_check
        _
      $region10: #{tpu_custom_call.1} parent=5 // pred_check_branch
        %168 = sbr.rel (%p165) target = $region12
      $region11: #{tpu_custom_call.1} parent=5 // pred_region
        %s169 = ssub.s32 %s19, 1
        // Predicated region
        $region13: #{tpu_custom_call.1} parent=11 // pred_check
          %p170 = pneg %p66
        $region14: #{tpu_custom_call.1} parent=11 // pred_check_branch
          %172 = sbr.rel (%p170) target = $region16
        $region15: #{tpu_custom_call.1} parent=11 // pred_region
          %174 = vsyncadd [#allocation6], 0
          %s175 = sshll.u32 %s1, 4
          %s176 = int_to_ptr.hbm [resolvable:$true] %s175
          %s177 = sshll.u32 [#allocation5], 4
          %s178 = int_to_ptr.vmem [resolvable:$true] %s177
          %183 = dma.hbm_to_vmem [thread:$0]  %s176, 2048, %s178, [#allocation6], 128, 128, 8
        $region16: #{tpu_custom_call.1} parent=11 // pred_fallthru
          _
        // Predicated region
        $region17: #{tpu_custom_call.1} parent=11 // pred_check
          %p184 = pneg %p87
        $region18: #{tpu_custom_call.1} parent=11 // pred_check_branch
          %186 = sbr.rel (%p184) target = $region20
        $region19: #{tpu_custom_call.1} parent=11 // pred_region
          %188 = vsyncadd [#allocation6], 0
          %s189 = sshll.u32 %s2, 4
          %s190 = int_to_ptr.hbm [resolvable:$true] %s189
          %s191 = sshll.u32 [#allocation7], 4
          %s192 = int_to_ptr.vmem [resolvable:$true] %s191
          %197 = dma.hbm_to_vmem [thread:$0]  %s190, 4096, %s192, [#allocation6], 128, 128, 8
        $region20: #{tpu_custom_call.1} parent=11 // pred_fallthru
          _
        // Predicated region
        $region21: #{tpu_custom_call.1} parent=11 // pred_check
          %p198 = pneg %p108
        $region22: #{tpu_custom_call.1} parent=11 // pred_check_branch
          %200 = sbr.rel (%p198) target = $region24
        $region23: #{tpu_custom_call.1} parent=11 // pred_region
          %202 = vsyncadd [#allocation9], 0
          %s203 = sshll.u32 %s3, 4
          %s204 = int_to_ptr.hbm [resolvable:$true] %s203
          %s205 = sshll.u32 [#allocation8], 4
          %s206 = int_to_ptr.vmem [resolvable:$true] %s205
          %211 = dma.hbm_to_vmem [thread:$0]  %s204, 2048, %s206, [#allocation9], 128, 128, 8
        $region24: #{tpu_custom_call.1} parent=11 // pred_fallthru
          _
        // Predicated region
        $region25: #{tpu_custom_call.1} parent=11 // pred_check
          %p212 = pneg %p129
        $region26: #{tpu_custom_call.1} parent=11 // pred_check_branch
          %214 = sbr.rel (%p212) target = $region28
        $region27: #{tpu_custom_call.1} parent=11 // pred_region
          %216 = vsyncadd [#allocation9], 0
          %s218 = sshll.u32 %s4, 4
          %s219 = int_to_ptr.hbm [resolvable:$true] %s218
          %s220 = sshll.u32 [#allocation10], 4
          %s221 = int_to_ptr.vmem [resolvable:$true] %s220
          %223 = dma.hbm_to_vmem [thread:$0]  %s219, 64, %s221, [#allocation9]
        $region28: #{tpu_custom_call.1} parent=11 // pred_fallthru
          _
      $region12: #{tpu_custom_call.1} parent=5 // pred_fallthru
        _
      %p224 = scmp.lt.s32.totalorder %s19, 2
      // Predicated region
      $region29: #{tpu_custom_call.1} parent=5 // pred_check
        %p225 = pneg %p224
      $region30: #{tpu_custom_call.1} parent=5 // pred_check_branch
        %227 = sbr.rel (%p225) target = $region32
      $region31: #{tpu_custom_call.1} parent=5 // pred_region
        // Predicated region
        $region33: #{tpu_custom_call.1} parent=31 // pred_check
          %p228 = pneg %p39
        $region34: #{tpu_custom_call.1} parent=31 // pred_check_branch
          %230 = sbr.rel (%p228) target = $region36
        $region35: #{tpu_custom_call.1} parent=31 // pred_region
          %s231 = sand.u32 %s29, 1
          %s232 = scalar_lea.sflag [#allocation3], %s231
          %s233 = sand.u32 %s29, 1
          %s234 = smul.addr %s233, 128
          %s235 = scalar_lea.vmem [#allocation2], %s234
          %s236 = smul.u32 16, %s19
          %238 = vsyncadd %s232, 0
          %s239 = smul.addr %s236, 8
          %s240 = scalar_lea.hbm %s0, %s239
          %s241 = sshll.u32 %s240, 4
          %s242 = int_to_ptr.hbm [resolvable:$true] %s241
          %s243 = sshll.u32 %s235, 4
          %s244 = int_to_ptr.vmem [resolvable:$true] %s243
          %249 = dma.hbm_to_vmem [thread:$0]  %s242, 2048, %s244, %s232, 128, 128, 8
        $region36: #{tpu_custom_call.1} parent=31 // pred_fallthru
          _
      $region32: #{tpu_custom_call.1} parent=5 // pred_fallthru
        _
      %p250 = scmp.le.s32.totalorder 1, %s19
      %p251 = scmp.lt.s32.totalorder %s19, 3
      %p252 = pnand %p250, %p251
      %p253 = pneg %p252
      // Predicated region
      $region37: #{tpu_custom_call.1} parent=5 // pred_check
        _
      $region38: #{tpu_custom_call.1} parent=5 // pred_check_branch
        %255 = sbr.rel (%p252) target = $region40
      $region39: #{tpu_custom_call.1} parent=5 // pred_region
        %s256 = ssub.s32 %s19, 1
        %s257 = sand.u32 %s32, 1
        %s258 = scalar_lea.sflag [#allocation3], %s257
        %s259 = sand.u32 %s32, 1
        %s260 = smul.addr %s259, 128
        %s261 = scalar_lea.vmem [#allocation2], %s260
        // Predicated region
        $region41: #{tpu_custom_call.1} parent=39 // pred_check
          %p262 = pneg %p45
        $region42: #{tpu_custom_call.1} parent=39 // pred_check_branch
          %264 = sbr.rel (%p262) target = $region44
        $region43: #{tpu_custom_call.1} parent=39 // pred_region
          %266 = dma.done %s258, 2048
        $region44: #{tpu_custom_call.1} parent=39 // pred_fallthru
          _
        // Predicated region
        $region45: #{tpu_custom_call.1} parent=39 // pred_check
          %p267 = pneg %p66
        $region46: #{tpu_custom_call.1} parent=39 // pred_check_branch
          %269 = sbr.rel (%p267) target = $region48
        $region47: #{tpu_custom_call.1} parent=39 // pred_region
          %271 = dma.done [#allocation6], 2048
        $region48: #{tpu_custom_call.1} parent=39 // pred_fallthru
          _
        // Predicated region
        $region49: #{tpu_custom_call.1} parent=39 // pred_check
          %p272 = pneg %p87
        $region50: #{tpu_custom_call.1} parent=39 // pred_check_branch
          %274 = sbr.rel (%p272) target = $region52
        $region51: #{tpu_custom_call.1} parent=39 // pred_region
          %276 = dma.done [#allocation6], 4096
        $region52: #{tpu_custom_call.1} parent=39 // pred_fallthru
          _
        // Predicated region
        $region53: #{tpu_custom_call.1} parent=39 // pred_check
          %p277 = pneg %p108
        $region54: #{tpu_custom_call.1} parent=39 // pred_check_branch
          %279 = sbr.rel (%p277) target = $region56
        $region55: #{tpu_custom_call.1} parent=39 // pred_region
          %281 = dma.done [#allocation9], 2048
        $region56: #{tpu_custom_call.1} parent=39 // pred_fallthru
          _
        // Predicated region
        $region57: #{tpu_custom_call.1} parent=39 // pred_check
          %p282 = pneg %p129
        $region58: #{tpu_custom_call.1} parent=39 // pred_check_branch
          %284 = sbr.rel (%p282) target = $region60
        $region59: #{tpu_custom_call.1} parent=39 // pred_region
          %286 = dma.done [#allocation9], 64
        $region60: #{tpu_custom_call.1} parent=39 // pred_fallthru
          _
        %s287 = sand.u32 %s32, 1
        %s288 = scalar_lea.sflag [#allocation3], %s287
        %s289 = sand.u32 %s32, 1
        %s290 = smul.addr %s289, 128
        %s291 = scalar_lea.vmem [#allocation2], %s290
        %p292 = pneg %p45
        %p293 = pneg %p42
        %p294 = pneg %p66
        %p295 = pneg %p63
        %p296 = pneg %p87
        %p297 = pneg %p84
        %p298 = pneg %p108
        %p299 = pneg %p105
        %p300 = pneg %p129
        %p301 = pneg %p126
        %p302 = pneg %p155
        %p303 = pneg %p152
        %s304 = sand.u32 %s142, 1
        %s305 = scalar_lea.sflag [#allocation4], %s304
        %s306 = sand.u32 %s142, 1
        %s307 = smul.addr %s306, 128
        %s308 = scalar_lea.vmem [#allocation11], %s307
        %s309 = smul.u32 16, %s24
        %s310 = smul.u32 16, %s24
        %v311 = vld [vmem:[%s261] sm:$0xff]
        %v312 = vld [vmem:[%s261 + $0x8] sm:$0xff]
        %v313 = vld [vmem:[%s261 + $0x10] sm:$0xff]
        %v314 = vld [vmem:[%s261 + $0x18] sm:$0xff]
        %v315 = vld [vmem:[%s261 + $0x20] sm:$0xff]
        %v316 = vld [vmem:[%s261 + $0x28] sm:$0xff]
        %v317 = vld [vmem:[%s261 + $0x30] sm:$0xff]
        %v318 = vld [vmem:[%s261 + $0x38] sm:$0xff]
        %v319 = vld [vmem:[%s261 + $0x40] sm:$0xff]
        %v320 = vld [vmem:[%s261 + $0x48] sm:$0xff]
        %v321 = vld [vmem:[%s261 + $0x50] sm:$0xff]
        %v322 = vld [vmem:[%s261 + $0x58] sm:$0xff]
        %v323 = vld [vmem:[%s261 + $0x60] sm:$0xff]
        %v324 = vld [vmem:[%s261 + $0x68] sm:$0xff]
        %v325 = vld [vmem:[%s261 + $0x70] sm:$0xff]
        %v326 = vld [vmem:[%s261 + $0x78] sm:$0xff]
        %v327 = vld [vmem:[#allocation5] sm:$0xff]
        %v328 = vld [vmem:[#allocation5 + $0x8] sm:$0xff]
        %v329 = vld [vmem:[#allocation5 + $0x10] sm:$0xff]
        %v330 = vld [vmem:[#allocation5 + $0x18] sm:$0xff]
        %v331 = vld [vmem:[#allocation5 + $0x20] sm:$0xff]
        %v332 = vld [vmem:[#allocation5 + $0x28] sm:$0xff]
        %v333 = vld [vmem:[#allocation5 + $0x30] sm:$0xff]
        %v334 = vld [vmem:[#allocation5 + $0x38] sm:$0xff]
        %v335 = vld [vmem:[#allocation5 + $0x40] sm:$0xff]
        %v336 = vld [vmem:[#allocation5 + $0x48] sm:$0xff]
        %v337 = vld [vmem:[#allocation5 + $0x50] sm:$0xff]
        %v338 = vld [vmem:[#allocation5 + $0x58] sm:$0xff]
        %v339 = vld [vmem:[#allocation5 + $0x60] sm:$0xff]
        %v340 = vld [vmem:[#allocation5 + $0x68] sm:$0xff]
        %v341 = vld [vmem:[#allocation5 + $0x70] sm:$0xff]
        %v342 = vld [vmem:[#allocation5 + $0x78] sm:$0xff]
        %v343 = vld [vmem:[#allocation10] sm:$0x1]
        %v344 = vperm.slane %v343, 0
        %345 = vmatpush.msra.mxu0 %v342
        %346 = vmatpush.msra.mxu0 %v341
        %347 = vmatpush.msra.mxu0 %v340
        %348 = vmatpush.msra.mxu0 %v339
        %349 = vmatpush.msra.mxu0 %v338
        %350 = vmatpush.msra.mxu0 %v337
        %351 = vmatpush.msra.mxu0 %v336
        %352 = vmatpush.msra.mxu0 %v335
        %353 = vmatpush.msra.mxu0 %v334
        %354 = vmatpush.msra.mxu0 %v333
        %355 = vmatpush.msra.mxu0 %v332
        %356 = vmatpush.msra.mxu0 %v331
        %357 = vmatpush.msra.mxu0 %v330
        %358 = vmatpush.msra.mxu0 %v329
        %359 = vmatpush.msra.mxu0 %v328
        %360 = vmatpush.msra.mxu0 %v327
        %361 = vmatmul.f32.gmra.mxu0 %v311
        %v362 = vpop.f32.mrf.mxu0
        %v363 = vadd.f32 %v344, %v362
        %364 = vmatmul.f32.gmra.mxu0 %v312
        %v365 = vpop.f32.mrf.mxu0
        %v366 = vadd.f32 %v344, %v365
        %367 = vmatmul.f32.gmra.mxu0 %v313
        %v368 = vpop.f32.mrf.mxu0
        %v369 = vadd.f32 %v344, %v368
        %370 = vmatmul.f32.gmra.mxu0 %v314
        %v371 = vpop.f32.mrf.mxu0
        %v372 = vadd.f32 %v344, %v371
        %373 = vmatmul.f32.gmra.mxu0 %v315
        %v374 = vpop.f32.mrf.mxu0
        %v375 = vadd.f32 %v344, %v374
        %376 = vmatmul.f32.gmra.mxu0 %v316
        %v377 = vpop.f32.mrf.mxu0
        %v378 = vadd.f32 %v344, %v377
        %379 = vmatmul.f32.gmra.mxu0 %v317
        %v380 = vpop.f32.mrf.mxu0
        %v381 = vadd.f32 %v344, %v380
        %382 = vmatmul.f32.gmra.mxu0 %v318
        %v383 = vpop.f32.mrf.mxu0
        %v384 = vadd.f32 %v344, %v383
        %385 = vmatmul.f32.gmra.mxu0 %v319
        %v386 = vpop.f32.mrf.mxu0
        %v387 = vadd.f32 %v344, %v386
        %388 = vmatmul.f32.gmra.mxu0 %v320
        %v389 = vpop.f32.mrf.mxu0
        %v390 = vadd.f32 %v344, %v389
        %391 = vmatmul.f32.gmra.mxu0 %v321
        %v392 = vpop.f32.mrf.mxu0
        %v393 = vadd.f32 %v344, %v392
        %394 = vmatmul.f32.gmra.mxu0 %v322
        %v395 = vpop.f32.mrf.mxu0
        %v396 = vadd.f32 %v344, %v395
        %397 = vmatmul.f32.gmra.mxu0 %v323
        %v398 = vpop.f32.mrf.mxu0
        %v399 = vadd.f32 %v344, %v398
        %400 = vmatmul.f32.gmra.mxu0 %v324
        %v401 = vpop.f32.mrf.mxu0
        %v402 = vadd.f32 %v344, %v401
        %403 = vmatmul.f32.gmra.mxu0 %v325
        %v404 = vpop.f32.mrf.mxu0
        %v405 = vadd.f32 %v344, %v404
        %406 = vmatmul.f32.gmra.mxu0 %v326
        %v407 = vpop.f32.mrf.mxu0
        %v408 = vadd.f32 %v344, %v407
        %409 = vdwg.mxu0
        %vm410 = vcmp.gt.f32.partialorder %v363, 0.0
        %vm411 = vcmp.gt.f32.partialorder %v366, 0.0
        %vm412 = vcmp.gt.f32.partialorder %v369, 0.0
        %vm413 = vcmp.gt.f32.partialorder %v372, 0.0
        %vm414 = vcmp.gt.f32.partialorder %v375, 0.0
        %vm415 = vcmp.gt.f32.partialorder %v378, 0.0
        %vm416 = vcmp.gt.f32.partialorder %v381, 0.0
        %vm417 = vcmp.gt.f32.partialorder %v384, 0.0
        %vm418 = vcmp.gt.f32.partialorder %v387, 0.0
        %vm419 = vcmp.gt.f32.partialorder %v390, 0.0
        %vm420 = vcmp.gt.f32.partialorder %v393, 0.0
        %vm421 = vcmp.gt.f32.partialorder %v396, 0.0
        %vm422 = vcmp.gt.f32.partialorder %v399, 0.0
        %vm423 = vcmp.gt.f32.partialorder %v402, 0.0
        %vm424 = vcmp.gt.f32.partialorder %v405, 0.0
        %vm425 = vcmp.gt.f32.partialorder %v408, 0.0
        %v426 = vmul.f32 %v363, 0.2
        %v427 = vmul.f32 %v366, 0.2
        %v428 = vmul.f32 %v369, 0.2
        %v429 = vmul.f32 %v372, 0.2
        %v430 = vmul.f32 %v375, 0.2
        %v431 = vmul.f32 %v378, 0.2
        %v432 = vmul.f32 %v381, 0.2
        %v433 = vmul.f32 %v384, 0.2
        %v434 = vmul.f32 %v387, 0.2
        %v435 = vmul.f32 %v390, 0.2
        %v436 = vmul.f32 %v393, 0.2
        %v437 = vmul.f32 %v396, 0.2
        %v438 = vmul.f32 %v399, 0.2
        %v439 = vmul.f32 %v402, 0.2
        %v440 = vmul.f32 %v405, 0.2
        %v441 = vmul.f32 %v408, 0.2
        %v442 = vsel %vm410, %v363, %v426
        %v443 = vsel %vm411, %v366, %v427
        %v444 = vsel %vm412, %v369, %v428
        %v445 = vsel %vm413, %v372, %v429
        %v446 = vsel %vm414, %v375, %v430
        %v447 = vsel %vm415, %v378, %v431
        %v448 = vsel %vm416, %v381, %v432
        %v449 = vsel %vm417, %v384, %v433
        %v450 = vsel %vm418, %v387, %v434
        %v451 = vsel %vm419, %v390, %v435
        %v452 = vsel %vm420, %v393, %v436
        %v453 = vsel %vm421, %v396, %v437
        %v454 = vsel %vm422, %v399, %v438
        %v455 = vsel %vm423, %v402, %v439
        %v456 = vsel %vm424, %v405, %v440
        %v457 = vsel %vm425, %v408, %v441
        %v458 = vld [vmem:[#allocation7] sm:$0xff]
        %v459 = vld [vmem:[#allocation7 + $0x8] sm:$0xff]
        %v460 = vld [vmem:[#allocation7 + $0x10] sm:$0xff]
        %v461 = vld [vmem:[#allocation7 + $0x18] sm:$0xff]
        %v462 = vld [vmem:[#allocation7 + $0x20] sm:$0xff]
        %v463 = vld [vmem:[#allocation7 + $0x28] sm:$0xff]
        %v464 = vld [vmem:[#allocation7 + $0x30] sm:$0xff]
        %v465 = vld [vmem:[#allocation7 + $0x38] sm:$0xff]
        %v466 = vld [vmem:[#allocation7 + $0x40] sm:$0xff]
        %v467 = vld [vmem:[#allocation7 + $0x48] sm:$0xff]
        %v468 = vld [vmem:[#allocation7 + $0x50] sm:$0xff]
        %v469 = vld [vmem:[#allocation7 + $0x58] sm:$0xff]
        %v470 = vld [vmem:[#allocation7 + $0x60] sm:$0xff]
        %v471 = vld [vmem:[#allocation7 + $0x68] sm:$0xff]
        %v472 = vld [vmem:[#allocation7 + $0x70] sm:$0xff]
        %v473 = vld [vmem:[#allocation7 + $0x78] sm:$0xff]
        %v474 = vld [vmem:[#allocation10 + $0x1] sm:$0x1]
        %v475 = vperm.slane %v474, 0
        %476 = vmatpush.msra.mxu0 %v473
        %477 = vmatpush.msra.mxu0 %v472
        %478 = vmatpush.msra.mxu0 %v471
        %479 = vmatpush.msra.mxu0 %v470
        %480 = vmatpush.msra.mxu0 %v469
        %481 = vmatpush.msra.mxu0 %v468
        %482 = vmatpush.msra.mxu0 %v467
        %483 = vmatpush.msra.mxu0 %v466
        %484 = vmatpush.msra.mxu0 %v465
        %485 = vmatpush.msra.mxu0 %v464
        %486 = vmatpush.msra.mxu0 %v463
        %487 = vmatpush.msra.mxu0 %v462
        %488 = vmatpush.msra.mxu0 %v461
        %489 = vmatpush.msra.mxu0 %v460
        %490 = vmatpush.msra.mxu0 %v459
        %491 = vmatpush.msra.mxu0 %v458
        %492 = vmatmul.f32.gmra.mxu0 %v442
        %v493 = vpop.f32.mrf.mxu0
        %v494 = vadd.f32 %v475, %v493
        %495 = vmatmul.f32.gmra.mxu0 %v443
        %v496 = vpop.f32.mrf.mxu0
        %v497 = vadd.f32 %v475, %v496
        %498 = vmatmul.f32.gmra.mxu0 %v444
        %v499 = vpop.f32.mrf.mxu0
        %v500 = vadd.f32 %v475, %v499
        %501 = vmatmul.f32.gmra.mxu0 %v445
        %v502 = vpop.f32.mrf.mxu0
        %v503 = vadd.f32 %v475, %v502
        %504 = vmatmul.f32.gmra.mxu0 %v446
        %v505 = vpop.f32.mrf.mxu0
        %v506 = vadd.f32 %v475, %v505
        %507 = vmatmul.f32.gmra.mxu0 %v447
        %v508 = vpop.f32.mrf.mxu0
        %v509 = vadd.f32 %v475, %v508
        %510 = vmatmul.f32.gmra.mxu0 %v448
        %v511 = vpop.f32.mrf.mxu0
        %v512 = vadd.f32 %v475, %v511
        %513 = vmatmul.f32.gmra.mxu0 %v449
        %v514 = vpop.f32.mrf.mxu0
        %v515 = vadd.f32 %v475, %v514
        %516 = vmatmul.f32.gmra.mxu0 %v450
        %v517 = vpop.f32.mrf.mxu0
        %v518 = vadd.f32 %v475, %v517
        %519 = vmatmul.f32.gmra.mxu0 %v451
        %v520 = vpop.f32.mrf.mxu0
        %v521 = vadd.f32 %v475, %v520
        %522 = vmatmul.f32.gmra.mxu0 %v452
        %v523 = vpop.f32.mrf.mxu0
        %v524 = vadd.f32 %v475, %v523
        %525 = vmatmul.f32.gmra.mxu0 %v453
        %v526 = vpop.f32.mrf.mxu0
        %v527 = vadd.f32 %v475, %v526
        %528 = vmatmul.f32.gmra.mxu0 %v454
        %v529 = vpop.f32.mrf.mxu0
        %v530 = vadd.f32 %v475, %v529
        %531 = vmatmul.f32.gmra.mxu0 %v455
        %v532 = vpop.f32.mrf.mxu0
        %v533 = vadd.f32 %v475, %v532
        %534 = vmatmul.f32.gmra.mxu0 %v456
        %v535 = vpop.f32.mrf.mxu0
        %v536 = vadd.f32 %v475, %v535
        %537 = vmatmul.f32.gmra.mxu0 %v457
        %v538 = vpop.f32.mrf.mxu0
        %v539 = vadd.f32 %v475, %v538
        %540 = vdwg.mxu0
        %vm541 = vcmp.gt.f32.partialorder %v494, 0.0
        %vm542 = vcmp.gt.f32.partialorder %v497, 0.0
        %vm543 = vcmp.gt.f32.partialorder %v500, 0.0
        %vm544 = vcmp.gt.f32.partialorder %v503, 0.0
        %vm545 = vcmp.gt.f32.partialorder %v506, 0.0
        %vm546 = vcmp.gt.f32.partialorder %v509, 0.0
        %vm547 = vcmp.gt.f32.partialorder %v512, 0.0
        %vm548 = vcmp.gt.f32.partialorder %v515, 0.0
        %vm549 = vcmp.gt.f32.partialorder %v518, 0.0
        %vm550 = vcmp.gt.f32.partialorder %v521, 0.0
        %vm551 = vcmp.gt.f32.partialorder %v524, 0.0
        %vm552 = vcmp.gt.f32.partialorder %v527, 0.0
        %vm553 = vcmp.gt.f32.partialorder %v530, 0.0
        %vm554 = vcmp.gt.f32.partialorder %v533, 0.0
        %vm555 = vcmp.gt.f32.partialorder %v536, 0.0
        %vm556 = vcmp.gt.f32.partialorder %v539, 0.0
        %v557 = vmul.f32 %v494, 0.2
        %v558 = vmul.f32 %v497, 0.2
        %v559 = vmul.f32 %v500, 0.2
        %v560 = vmul.f32 %v503, 0.2
        %v561 = vmul.f32 %v506, 0.2
        %v562 = vmul.f32 %v509, 0.2
        %v563 = vmul.f32 %v512, 0.2
        %v564 = vmul.f32 %v515, 0.2
        %v565 = vmul.f32 %v518, 0.2
        %v566 = vmul.f32 %v521, 0.2
        %v567 = vmul.f32 %v524, 0.2
        %v568 = vmul.f32 %v527, 0.2
        %v569 = vmul.f32 %v530, 0.2
        %v570 = vmul.f32 %v533, 0.2
        %v571 = vmul.f32 %v536, 0.2
        %v572 = vmul.f32 %v539, 0.2
        %v573 = vsel %vm541, %v494, %v557
        %v574 = vsel %vm542, %v497, %v558
        %v575 = vsel %vm543, %v500, %v559
        %v576 = vsel %vm544, %v503, %v560
        %v577 = vsel %vm545, %v506, %v561
        %v578 = vsel %vm546, %v509, %v562
        %v579 = vsel %vm547, %v512, %v563
        %v580 = vsel %vm548, %v515, %v564
        %v581 = vsel %vm549, %v518, %v565
        %v582 = vsel %vm550, %v521, %v566
        %v583 = vsel %vm551, %v524, %v567
        %v584 = vsel %vm552, %v527, %v568
        %v585 = vsel %vm553, %v530, %v569
        %v586 = vsel %vm554, %v533, %v570
        %v587 = vsel %vm555, %v536, %v571
        %v588 = vsel %vm556, %v539, %v572
        %s589 = scalar_lea.vmem [#allocation7], 128
        %v590 = vld [vmem:[%s589] sm:$0xff]
        %v591 = vld [vmem:[%s589 + $0x8] sm:$0xff]
        %v592 = vld [vmem:[%s589 + $0x10] sm:$0xff]
        %v593 = vld [vmem:[%s589 + $0x18] sm:$0xff]
        %v594 = vld [vmem:[%s589 + $0x20] sm:$0xff]
        %v595 = vld [vmem:[%s589 + $0x28] sm:$0xff]
        %v596 = vld [vmem:[%s589 + $0x30] sm:$0xff]
        %v597 = vld [vmem:[%s589 + $0x38] sm:$0xff]
        %v598 = vld [vmem:[%s589 + $0x40] sm:$0xff]
        %v599 = vld [vmem:[%s589 + $0x48] sm:$0xff]
        %v600 = vld [vmem:[%s589 + $0x50] sm:$0xff]
        %v601 = vld [vmem:[%s589 + $0x58] sm:$0xff]
        %v602 = vld [vmem:[%s589 + $0x60] sm:$0xff]
        %v603 = vld [vmem:[%s589 + $0x68] sm:$0xff]
        %v604 = vld [vmem:[%s589 + $0x70] sm:$0xff]
        %v605 = vld [vmem:[%s589 + $0x78] sm:$0xff]
        %v606 = vld [vmem:[#allocation10 + $0x2] sm:$0x1]
        %v607 = vperm.slane %v606, 0
        %608 = vmatpush.msra.mxu0 %v605
        %609 = vmatpush.msra.mxu0 %v604
        %610 = vmatpush.msra.mxu0 %v603
        %611 = vmatpush.msra.mxu0 %v602
        %612 = vmatpush.msra.mxu0 %v601
        %613 = vmatpush.msra.mxu0 %v600
        %614 = vmatpush.msra.mxu0 %v599
        %615 = vmatpush.msra.mxu0 %v598
        %616 = vmatpush.msra.mxu0 %v597
        %617 = vmatpush.msra.mxu0 %v596
        %618 = vmatpush.msra.mxu0 %v595
        %619 = vmatpush.msra.mxu0 %v594
        %620 = vmatpush.msra.mxu0 %v593
        %621 = vmatpush.msra.mxu0 %v592
        %622 = vmatpush.msra.mxu0 %v591
        %623 = vmatpush.msra.mxu0 %v590
        %624 = vmatmul.f32.gmra.mxu0 %v573
        %v625 = vpop.f32.mrf.mxu0
        %v626 = vadd.f32 %v607, %v625
        %627 = vmatmul.f32.gmra.mxu0 %v574
        %v628 = vpop.f32.mrf.mxu0
        %v629 = vadd.f32 %v607, %v628
        %630 = vmatmul.f32.gmra.mxu0 %v575
        %v631 = vpop.f32.mrf.mxu0
        %v632 = vadd.f32 %v607, %v631
        %633 = vmatmul.f32.gmra.mxu0 %v576
        %v634 = vpop.f32.mrf.mxu0
        %v635 = vadd.f32 %v607, %v634
        %636 = vmatmul.f32.gmra.mxu0 %v577
        %v637 = vpop.f32.mrf.mxu0
        %v638 = vadd.f32 %v607, %v637
        %639 = vmatmul.f32.gmra.mxu0 %v578
        %v640 = vpop.f32.mrf.mxu0
        %v641 = vadd.f32 %v607, %v640
        %642 = vmatmul.f32.gmra.mxu0 %v579
        %v643 = vpop.f32.mrf.mxu0
        %v644 = vadd.f32 %v607, %v643
        %645 = vmatmul.f32.gmra.mxu0 %v580
        %v646 = vpop.f32.mrf.mxu0
        %v647 = vadd.f32 %v607, %v646
        %648 = vmatmul.f32.gmra.mxu0 %v581
        %v649 = vpop.f32.mrf.mxu0
        %v650 = vadd.f32 %v607, %v649
        %651 = vmatmul.f32.gmra.mxu0 %v582
        %v652 = vpop.f32.mrf.mxu0
        %v653 = vadd.f32 %v607, %v652
        %654 = vmatmul.f32.gmra.mxu0 %v583
        %v655 = vpop.f32.mrf.mxu0
        %v656 = vadd.f32 %v607, %v655
        %657 = vmatmul.f32.gmra.mxu0 %v584
        %v658 = vpop.f32.mrf.mxu0
        %v659 = vadd.f32 %v607, %v658
        %660 = vmatmul.f32.gmra.mxu0 %v585
        %v661 = vpop.f32.mrf.mxu0
        %v662 = vadd.f32 %v607, %v661
        %663 = vmatmul.f32.gmra.mxu0 %v586
        %v664 = vpop.f32.mrf.mxu0
        %v665 = vadd.f32 %v607, %v664
        %666 = vmatmul.f32.gmra.mxu0 %v587
        %v667 = vpop.f32.mrf.mxu0
        %v668 = vadd.f32 %v607, %v667
        %669 = vmatmul.f32.gmra.mxu0 %v588
        %v670 = vpop.f32.mrf.mxu0
        %v671 = vadd.f32 %v607, %v670
        %672 = vdwg.mxu0
        %vm673 = vcmp.gt.f32.partialorder %v626, 0.0
        %vm674 = vcmp.gt.f32.partialorder %v629, 0.0
        %vm675 = vcmp.gt.f32.partialorder %v632, 0.0
        %vm676 = vcmp.gt.f32.partialorder %v635, 0.0
        %vm677 = vcmp.gt.f32.partialorder %v638, 0.0
        %vm678 = vcmp.gt.f32.partialorder %v641, 0.0
        %vm679 = vcmp.gt.f32.partialorder %v644, 0.0
        %vm680 = vcmp.gt.f32.partialorder %v647, 0.0
        %vm681 = vcmp.gt.f32.partialorder %v650, 0.0
        %vm682 = vcmp.gt.f32.partialorder %v653, 0.0
        %vm683 = vcmp.gt.f32.partialorder %v656, 0.0
        %vm684 = vcmp.gt.f32.partialorder %v659, 0.0
        %vm685 = vcmp.gt.f32.partialorder %v662, 0.0
        %vm686 = vcmp.gt.f32.partialorder %v665, 0.0
        %vm687 = vcmp.gt.f32.partialorder %v668, 0.0
        %vm688 = vcmp.gt.f32.partialorder %v671, 0.0
        %v689 = vmul.f32 %v626, 0.2
        %v690 = vmul.f32 %v629, 0.2
        %v691 = vmul.f32 %v632, 0.2
        %v692 = vmul.f32 %v635, 0.2
        %v693 = vmul.f32 %v638, 0.2
        %v694 = vmul.f32 %v641, 0.2
        %v695 = vmul.f32 %v644, 0.2
        %v696 = vmul.f32 %v647, 0.2
        %v697 = vmul.f32 %v650, 0.2
        %v698 = vmul.f32 %v653, 0.2
        %v699 = vmul.f32 %v656, 0.2
        %v700 = vmul.f32 %v659, 0.2
        %v701 = vmul.f32 %v662, 0.2
        %v702 = vmul.f32 %v665, 0.2
        %v703 = vmul.f32 %v668, 0.2
        %v704 = vmul.f32 %v671, 0.2
        %v705 = vsel %vm673, %v626, %v689
        %v706 = vsel %vm674, %v629, %v690
        %v707 = vsel %vm675, %v632, %v691
        %v708 = vsel %vm676, %v635, %v692
        %v709 = vsel %vm677, %v638, %v693
        %v710 = vsel %vm678, %v641, %v694
        %v711 = vsel %vm679, %v644, %v695
        %v712 = vsel %vm680, %v647, %v696
        %v713 = vsel %vm681, %v650, %v697
        %v714 = vsel %vm682, %v653, %v698
        %v715 = vsel %vm683, %v656, %v699
        %v716 = vsel %vm684, %v659, %v700
        %v717 = vsel %vm685, %v662, %v701
        %v718 = vsel %vm686, %v665, %v702
        %v719 = vsel %vm687, %v668, %v703
        %v720 = vsel %vm688, %v671, %v704
        %v721 = vld [vmem:[#allocation8] sm:$0xff]
        %v722 = vld [vmem:[#allocation8 + $0x8] sm:$0xff]
        %v723 = vld [vmem:[#allocation8 + $0x10] sm:$0xff]
        %v724 = vld [vmem:[#allocation8 + $0x18] sm:$0xff]
        %v725 = vld [vmem:[#allocation8 + $0x20] sm:$0xff]
        %v726 = vld [vmem:[#allocation8 + $0x28] sm:$0xff]
        %v727 = vld [vmem:[#allocation8 + $0x30] sm:$0xff]
        %v728 = vld [vmem:[#allocation8 + $0x38] sm:$0xff]
        %v729 = vld [vmem:[#allocation8 + $0x40] sm:$0xff]
        %v730 = vld [vmem:[#allocation8 + $0x48] sm:$0xff]
        %v731 = vld [vmem:[#allocation8 + $0x50] sm:$0xff]
        %v732 = vld [vmem:[#allocation8 + $0x58] sm:$0xff]
        %v733 = vld [vmem:[#allocation8 + $0x60] sm:$0xff]
        %v734 = vld [vmem:[#allocation8 + $0x68] sm:$0xff]
        %v735 = vld [vmem:[#allocation8 + $0x70] sm:$0xff]
        %v736 = vld [vmem:[#allocation8 + $0x78] sm:$0xff]
        %v737 = vld [vmem:[#allocation10 + $0x3] sm:$0x1]
        %v738 = vperm.slane %v737, 0
        %739 = vmatpush.msra.mxu0 %v736
        %740 = vmatpush.msra.mxu0 %v735
        %741 = vmatpush.msra.mxu0 %v734
        %742 = vmatpush.msra.mxu0 %v733
        %743 = vmatpush.msra.mxu0 %v732
        %744 = vmatpush.msra.mxu0 %v731
        %745 = vmatpush.msra.mxu0 %v730
        %746 = vmatpush.msra.mxu0 %v729
        %747 = vmatpush.msra.mxu0 %v728
        %748 = vmatpush.msra.mxu0 %v727
        %749 = vmatpush.msra.mxu0 %v726
        %750 = vmatpush.msra.mxu0 %v725
        %751 = vmatpush.msra.mxu0 %v724
        %752 = vmatpush.msra.mxu0 %v723
        %753 = vmatpush.msra.mxu0 %v722
        %754 = vmatpush.msra.mxu0 %v721
        %755 = vmatmul.f32.gmra.mxu0 %v705
        %v756 = vpop.f32.mrf.mxu0
        %v757 = vadd.f32 %v738, %v756
        %758 = vmatmul.f32.gmra.mxu0 %v706
        %v759 = vpop.f32.mrf.mxu0
        %v760 = vadd.f32 %v738, %v759
        %761 = vmatmul.f32.gmra.mxu0 %v707
        %v762 = vpop.f32.mrf.mxu0
        %v763 = vadd.f32 %v738, %v762
        %764 = vmatmul.f32.gmra.mxu0 %v708
        %v765 = vpop.f32.mrf.mxu0
        %v766 = vadd.f32 %v738, %v765
        %767 = vmatmul.f32.gmra.mxu0 %v709
        %v768 = vpop.f32.mrf.mxu0
        %v769 = vadd.f32 %v738, %v768
        %770 = vmatmul.f32.gmra.mxu0 %v710
        %v771 = vpop.f32.mrf.mxu0
        %v772 = vadd.f32 %v738, %v771
        %773 = vmatmul.f32.gmra.mxu0 %v711
        %v774 = vpop.f32.mrf.mxu0
        %v775 = vadd.f32 %v738, %v774
        %776 = vmatmul.f32.gmra.mxu0 %v712
        %v777 = vpop.f32.mrf.mxu0
        %v778 = vadd.f32 %v738, %v777
        %779 = vmatmul.f32.gmra.mxu0 %v713
        %v780 = vpop.f32.mrf.mxu0
        %v781 = vadd.f32 %v738, %v780
        %782 = vmatmul.f32.gmra.mxu0 %v714
        %v783 = vpop.f32.mrf.mxu0
        %v784 = vadd.f32 %v738, %v783
        %785 = vmatmul.f32.gmra.mxu0 %v715
        %v786 = vpop.f32.mrf.mxu0
        %v787 = vadd.f32 %v738, %v786
        %788 = vmatmul.f32.gmra.mxu0 %v716
        %v789 = vpop.f32.mrf.mxu0
        %v790 = vadd.f32 %v738, %v789
        %791 = vmatmul.f32.gmra.mxu0 %v717
        %v792 = vpop.f32.mrf.mxu0
        %v793 = vadd.f32 %v738, %v792
        %794 = vmatmul.f32.gmra.mxu0 %v718
        %v795 = vpop.f32.mrf.mxu0
        %v796 = vadd.f32 %v738, %v795
        %797 = vmatmul.f32.gmra.mxu0 %v719
        %v798 = vpop.f32.mrf.mxu0
        %v799 = vadd.f32 %v738, %v798
        %800 = vmatmul.f32.gmra.mxu0 %v720
        %v801 = vpop.f32.mrf.mxu0
        %v802 = vadd.f32 %v738, %v801
        %803 = vdwg.mxu0
        %v804 = vmax.f32 %v757, 0.0
        %v805 = vmax.f32 %v760, 0.0
        %v806 = vmax.f32 %v763, 0.0
        %v807 = vmax.f32 %v766, 0.0
        %v808 = vmax.f32 %v769, 0.0
        %v809 = vmax.f32 %v772, 0.0
        %v810 = vmax.f32 %v775, 0.0
        %v811 = vmax.f32 %v778, 0.0
        %v812 = vmax.f32 %v781, 0.0
        %v813 = vmax.f32 %v784, 0.0
        %v814 = vmax.f32 %v787, 0.0
        %v815 = vmax.f32 %v790, 0.0
        %v816 = vmax.f32 %v793, 0.0
        %v817 = vmax.f32 %v796, 0.0
        %v818 = vmax.f32 %v799, 0.0
        %v819 = vmax.f32 %v802, 0.0
        %820 = vst [vmem:[%s308] sm:$0xff] %v804
        %821 = vst [vmem:[%s308 + $0x8] sm:$0xff] %v805
        %822 = vst [vmem:[%s308 + $0x10] sm:$0xff] %v806
        %823 = vst [vmem:[%s308 + $0x18] sm:$0xff] %v807
        %824 = vst [vmem:[%s308 + $0x20] sm:$0xff] %v808
        %825 = vst [vmem:[%s308 + $0x28] sm:$0xff] %v809
        %826 = vst [vmem:[%s308 + $0x30] sm:$0xff] %v810
        %827 = vst [vmem:[%s308 + $0x38] sm:$0xff] %v811
        %828 = vst [vmem:[%s308 + $0x40] sm:$0xff] %v812
        %829 = vst [vmem:[%s308 + $0x48] sm:$0xff] %v813
        %830 = vst [vmem:[%s308 + $0x50] sm:$0xff] %v814
        %831 = vst [vmem:[%s308 + $0x58] sm:$0xff] %v815
        %832 = vst [vmem:[%s308 + $0x60] sm:$0xff] %v816
        %833 = vst [vmem:[%s308 + $0x68] sm:$0xff] %v817
        %834 = vst [vmem:[%s308 + $0x70] sm:$0xff] %v818
        %835 = vst [vmem:[%s308 + $0x78] sm:$0xff] %v819
        %s836 = sand.u32 %s142, 1
        %s837 = scalar_lea.sflag [#allocation4], %s836
        %s838 = sand.u32 %s142, 1
        %s839 = smul.addr %s838, 128
        %s840 = scalar_lea.vmem [#allocation11], %s839
        // Predicated region
        $region61: #{tpu_custom_call.1} parent=39 // pred_check
          %p841 = pneg %p152
        $region62: #{tpu_custom_call.1} parent=39 // pred_check_branch
          %843 = sbr.rel (%p841) target = $region64
        $region63: #{tpu_custom_call.1} parent=39 // pred_region
          %s844 = smul.u32 16, %s24
          %846 = vsyncadd %s837, 0
          %s847 = smul.addr %s844, 8
          %s848 = scalar_lea.hbm %s5, %s847
          %s849 = sshll.u32 %s840, 4
          %s850 = int_to_ptr.vmem [resolvable:$true] %s849
          %s851 = sshll.u32 %s848, 4
          %s852 = int_to_ptr.hbm [resolvable:$true] %s851
          %857 = dma.vmem_to_hbm [thread:$0]  %s850, 2048, %s852, %s837, 128, 128, 8
        $region64: #{tpu_custom_call.1} parent=39 // pred_fallthru
          _
      $region40: #{tpu_custom_call.1} parent=5 // pred_fallthru
        _
      %p858 = scmp.le.s32.totalorder 2, %s19
      // Predicated region
      $region65: #{tpu_custom_call.1} parent=5 // pred_check
        %p859 = pneg %p858
      $region66: #{tpu_custom_call.1} parent=5 // pred_check_branch
        %861 = sbr.rel (%p859) target = $region68
      $region67: #{tpu_custom_call.1} parent=5 // pred_region
        %s862 = ssub.s32 %s19, 2
        // Predicated region
        $region69: #{tpu_custom_call.1} parent=67 // pred_check
          %p863 = pneg %p158
        $region70: #{tpu_custom_call.1} parent=67 // pred_check_branch
          %865 = sbr.rel (%p863) target = $region72
        $region71: #{tpu_custom_call.1} parent=67 // pred_region
          %s866 = sand.u32 %s143, 1
          %s867 = scalar_lea.sflag [#allocation4], %s866
          %s868 = sand.u32 %s143, 1
          %s869 = smul.addr %s868, 128
          %s870 = scalar_lea.vmem [#allocation11], %s869
          %872 = dma.done %s867, 2048
        $region72: #{tpu_custom_call.1} parent=67 // pred_fallthru
          _
      $region68: #{tpu_custom_call.1} parent=5 // pred_fallthru
        _
    $region6: #{tpu_custom_call.1} parent=1 // loop_footer
      %s23 = sadd.s32 1, %s19
    $region7: #{tpu_custom_call.1} parent=1 // loop_footer_branch
      %18 = sbr.rel target = $region3
    $region8: #{tpu_custom_call.1} parent=1 // loop_exit
      _
    %873 = vsyncpa [#allocation3], 1
    %s874 = scalar_lea.sflag [#allocation3], 1
    %875 = vsyncpa %s874, 1
    %876 = vsyncpa [#allocation6], 1
    %877 = vsyncpa [#allocation9], 1
    %878 = vsyncpa [#allocation4], 1
    %s879 = scalar_lea.sflag [#allocation4], 1
    %880 = vsyncpa %s879, 1

</llo_original>
